<compile_context>
chip_gen: v7x
topology: tpu7x:2x2x1
jax: 0.10.0
libtpu: 0.0.40
codegen_flags: <defaults>
</compile_context>

<pallas_src>
import functools

import jax
import jax.numpy as jnp
from jax.experimental import pallas as pl
from jax.experimental.pallas import tpu as pltpu


def _round_up(x, m):
    return ((x + m - 1) // m) * m


def _focal_modulation(one_minus_pt, gamma: float):
    """(1 - p_t)**gamma.  Integer gamma (default 2.0) uses repeated VPU
    multiplies instead of the EUP log+exp pair behind jnp.power."""
    g = float(gamma)
    if g == 0.0:
        return jnp.ones_like(one_minus_pt)
    if g.is_integer() and 0 < g <= 8:
        n = int(g)
        result = None
        base = one_minus_pt
        while n:
            if n & 1:
                result = base if result is None else result * base
            n >>= 1
            if n:
                base = base * base
        return result
    return jnp.power(one_minus_pt, g)


def _focal_loss_kernel(yhat_ref, y_ref, alpha_ref, out_ref, acc_ref, *,
                       gamma: float, total_n: int, tile_n: int, half_tiles: int):
    c = pl.program_id(0)          # chunk (TensorCore) index -- "parallel" axis
    i = pl.program_id(1)          # row-tile index within chunk -- "arbitrary"

    @pl.when(i == 0)
    def _():
        acc_ref[...] = jnp.zeros_like(acc_ref)

    x = yhat_ref[...].astype(jnp.float32)                   # (C, tn) rows lane-dense
    # log-softmax over the class (sublane) axis; pt_y comes from exp(logpt_y),
    # so no explicit softmax divide is needed.
    m = jnp.max(x, axis=0, keepdims=True)                   # (1, tn)
    z = x - m
    lse = jnp.log(jnp.sum(jnp.exp(z), axis=0, keepdims=True))   # (1, tn)

    labels = y_ref[...]                                      # (1, tn) int32
    cls = jax.lax.broadcasted_iota(jnp.int32, x.shape, 0)    # (C, tn)
    onehot = cls == labels                                   # (C, tn) bool
    z_y = jnp.sum(jnp.where(onehot, z, 0.0), axis=0, keepdims=True)  # z[label]
    logpt_y = z_y - lse                                      # log softmax[label]
    pt_y = jnp.exp(logpt_y)                                  # softmax[label] (EUP)

    one_minus = jnp.maximum(1.0 - pt_y, 0.0)                 # clamp vs rounding
    mod = _focal_modulation(one_minus, gamma)
    alpha_y = alpha_ref[...]                                 # (1, tn) pre-gathered alpha[y]
    loss = -(alpha_y * mod * logpt_y)                        # (1, tn)

    # Mask rows past the true N (ragged tail / redundant clamped tile).
    t_logical = c * half_tiles + i
    col = t_logical * tile_n + jax.lax.broadcasted_iota(jnp.int32, (1, tile_n), 1)
    loss = jnp.where(col < total_n, loss, 0.0)

    acc_ref[...] += loss

    @pl.when(i == pl.num_programs(1) - 1)
    def _():
        partial = jnp.sum(acc_ref[...])                      # scalar collapse once
        out_ref[...] = jnp.zeros_like(out_ref) + partial


def _vmem_capacity_bytes():
    try:
        cap = getattr(pltpu.get_tpu_info(), "vmem_capacity_bytes", None)
        if cap:
            return int(cap)
    except Exception:
        pass
    return 64 << 20   # conservative default (v7x per-TensorCore VMEM)


def _pick_tile_n(n, c, itemsize, vmem_cap):
    n128 = _round_up(max(n, 1), 128)
    c_pad = _round_up(max(c, 1), 8)
    # double-buffered input blocks + ~5 f32 (C, tile_n) temporaries in the body
    bytes_per_col = (2 * itemsize + 5 * 4) * c_pad + 32
    t = (vmem_cap // 3) // bytes_per_col
    t = max(128, min((t // 128) * 128, 4096))
    return min(t, n128)


def focal_loss(yhat, y, alpha_vec=None, gamma: float = 2.0,
               reduction: str = "mean", tile_n=None):
    """Focal loss forward.  yhat: (N, C) float logits, y: (N,) int labels,
    alpha_vec: optional (C,) per-class weights (None == alpha = 1.0)."""
    N, C = yhat.shape

    # Lane-dense layout: rows on the lane axis, classes on sublanes.
    yhat_t = yhat.T                                             # (C, N)
    y_row = y.astype(jnp.int32).reshape(1, N)                   # (1, N)
    if alpha_vec is None:
        alpha_row = jnp.ones((1, N), jnp.float32)
    else:
        alpha_row = alpha_vec.astype(jnp.float32)[y].reshape(1, N)   # alpha[y]

    itemsize = jnp.dtype(yhat.dtype).itemsize
    vmem_cap = _vmem_capacity_bytes()
    if tile_n is None:
        tile_n = _pick_tile_n(N, C, itemsize, vmem_cap)
    else:
        tile_n = min(_round_up(int(tile_n), 128), _round_up(N, 128))

    grid_n = pl.cdiv(N, tile_n)                   # total row tiles
    num_chunks = 2 if grid_n >= 2 else 1          # one chunk per TC on v7x
    half_tiles = pl.cdiv(grid_n, num_chunks)

    def col_block(ci, ii):
        # Clamp so the (possibly redundant) last tile of an odd split stays
        # in-bounds; its rows are masked out inside the kernel.
        return jnp.minimum(ci * half_tiles + ii, grid_n - 1)

    kernel = functools.partial(_focal_loss_kernel, gamma=float(gamma),
                               total_n=N, tile_n=tile_n, half_tiles=half_tiles)

    c_pad = _round_up(C, 8)
    vmem_est = tile_n * ((2 * itemsize + 5 * 4) * c_pad + 64) + (2 << 20)
    vmem_limit = int(min(int(vmem_cap * 0.85), max(vmem_est, 32 << 20)))

    out = pl.pallas_call(
        kernel,
        out_shape=jax.ShapeDtypeStruct((num_chunks, 8, 128), jnp.float32),
        grid_spec=pltpu.PrefetchScalarGridSpec(
            num_scalar_prefetch=0,
            grid=(num_chunks, half_tiles),
            in_specs=[
                pl.BlockSpec((C, tile_n), lambda ci, ii: (0, col_block(ci, ii))),
                pl.BlockSpec((1, tile_n), lambda ci, ii: (0, col_block(ci, ii))),
                pl.BlockSpec((1, tile_n), lambda ci, ii: (0, col_block(ci, ii))),
            ],
            out_specs=pl.BlockSpec((1, 8, 128), lambda ci, ii: (ci, 0, 0)),
            scratch_shapes=[pltpu.VMEM((1, tile_n), jnp.float32)],
        ),
        compiler_params=pltpu.CompilerParams(
            dimension_semantics=("parallel", "arbitrary"),
            vmem_limit_bytes=vmem_limit,
        ),
    )(yhat_t, y_row, alpha_row)

    total = jnp.sum(out[:, 0, 0])                 # sum per-chunk partials
    if reduction == "sum":
        return total
    if reduction == "mean":
        return total / jnp.float32(N)
    # TODO(synk): reduction='none' (per-row loss output) not implemented in the kernel path.
    raise NotImplementedError(f"reduction={reduction!r}")


def _focal_loss_ref(yhat, y, alpha_vec, gamma=2.0):
    """Pure-JAX reference matching the PyTorch forward (reduction='mean')."""
    pt = jax.nn.softmax(yhat, axis=-1)
    logpt = jax.nn.log_softmax(yhat, axis=-1)
    if alpha_vec is None:
        alpha_y = jnp.ones((yhat.shape[0], 1), yhat.dtype)
    else:
        alpha_y = alpha_vec[y][:, None]
    mod = alpha_y * (1.0 - pt) ** gamma * logpt
    floss = -jnp.take_along_axis(mod, y[:, None], axis=-1)[:, 0]
    return jnp.mean(floss)


if __name__ == "__main__":
    key = jax.random.PRNGKey(0)
    N, C = 200, 10       # non-multiples exercise tail masking & sublane padding
    gamma = 2.0

    k1, k2 = jax.random.split(key)
    yhat = jax.random.normal(k1, (N, C), dtype=jnp.float32)
    y = jax.random.randint(k2, (N,), 0, C, dtype=jnp.int32)

    # Deterministic `freq` init -> alpha = freq * C / sum(freq), as in __init__.
    freq = jnp.arange(1, C + 1, dtype=jnp.float32)
    alpha_vec = freq * C / jnp.sum(freq)

    ref = _focal_loss_ref(yhat, y, alpha_vec, gamma=gamma)

    # 1) auto-sized single-tile path
    out = jax.block_until_ready(focal_loss(yhat, y, alpha_vec, gamma=gamma))
    assert jnp.allclose(out, ref, rtol=1e-5, atol=1e-5), (out, ref)

    # 2) multi-tile / dual-chunk path (2 TensorCores on v7x)
    out2 = jax.block_until_ready(focal_loss(yhat, y, alpha_vec, gamma=gamma, tile_n=128))
    assert jnp.allclose(out2, ref, rtol=1e-5, atol=1e-5), (out2, ref)

    # 3) odd number of row tiles -> exercises the clamped redundant tile
    N3 = 300
    k3, k4 = jax.random.split(k2)
    yhat3 = jax.random.normal(k3, (N3, C), dtype=jnp.float32)
    y3 = jax.random.randint(k4, (N3,), 0, C, dtype=jnp.int32)
    ref3 = _focal_loss_ref(yhat3, y3, alpha_vec, gamma=gamma)
    out3 = jax.block_until_ready(focal_loss(yhat3, y3, alpha_vec, gamma=gamma, tile_n=128))
    assert jnp.allclose(out3, ref3, rtol=1e-5, atol=1e-5), (out3, ref3)

    # 4) alpha=None and non-integer gamma (jnp.power path)
    ref4 = _focal_loss_ref(yhat, y, None, gamma=0.5)
    out4 = jax.block_until_ready(focal_loss(yhat, y, None, gamma=0.5))
    assert jnp.allclose(out4, ref4, rtol=1e-5, atol=1e-5), (out4, ref4)

    print("KERNEL_OK")
</pallas_src>

<mosaic_0001>
module attributes {stable_mosaic.version = 11 : i64} {
  func.func @_focal_loss_kernel(%arg0: i32, %arg1: i32, %arg2: memref<10x256xf32, #tpu.memory_space<vmem>>, %arg3: memref<1x256xi32, #tpu.memory_space<vmem>>, %arg4: memref<1x256xf32, #tpu.memory_space<vmem>>, %arg5: memref<1x8x128xf32, #tpu.memory_space<vmem>>, %arg6: memref<1x256xf32, #tpu.memory_space<vmem>>) attributes {dimension_semantics = [#tpu.dimension_semantics<parallel>, #tpu.dimension_semantics<arbitrary>], iteration_bounds = array<i64: 1, 1>, scalar_prefetch = 0 : i64, scratch_operands = 1 : i64, tpu.core_type = #tpu.core_type<tc>, window_params = [{transform_indices = @transform_0, window_bounds = array<i64: 10, 256>}, {transform_indices = @transform_1, window_bounds = array<i64: 1, 256>}, {transform_indices = @transform_2, window_bounds = array<i64: 1, 256>}, {transform_indices = @transform_3, window_bounds = array<i64: 1, 8, 128>}]} {
    %c0_i32 = arith.constant 0 : i32
    %0 = arith.cmpi eq, %arg1, %c0_i32 : i32
    %1 = arith.extui %0 : i1 to i32
    %c0_i32_0 = arith.constant 0 : i32
    %2 = arith.cmpi ne, %1, %c0_i32_0 : i32
    scf.if %2 {
      %cst_19 = arith.constant 0.000000e+00 : f32
      %48 = vector.broadcast %cst_19 : f32 to vector<1x256xf32>
      %c0_20 = arith.constant 0 : index
      %c0_21 = arith.constant 0 : index
      %49 = vector.load %arg6[%c0_20, %c0_21] : memref<1x256xf32, #tpu.memory_space<vmem>>, vector<1x256xf32>
      tpu.vector_store %arg6[%c0_20, %c0_21], %48 {strides = array<i32>} : memref<1x256xf32, #tpu.memory_space<vmem>>, vector<1x256xf32>,
    } else {
    }
    %c0 = arith.constant 0 : index
    %c0_1 = arith.constant 0 : index
    %3 = vector.load %arg2[%c0, %c0_1] : memref<10x256xf32, #tpu.memory_space<vmem>>, vector<10x256xf32>
    %cst = arith.constant dense<0xFF800000> : vector<256xf32>
    %4 = vector.multi_reduction <maximumf>, %3, %cst [0] : vector<10x256xf32> to vector<256xf32>
    %5 = vector.shape_cast %4 : vector<256xf32> to vector<1x256xf32>
    %6 = vector.broadcast %5 : vector<1x256xf32> to vector<10x256xf32>
    %7 = arith.subf %3, %6 : vector<10x256xf32>
    %8 = math.exp %7 : vector<10x256xf32>
    %cst_2 = arith.constant dense<0.000000e+00> : vector<256xf32>
    %9 = vector.multi_reduction <add>, %8, %cst_2 [0] : vector<10x256xf32> to vector<256xf32>
    %10 = vector.shape_cast %9 : vector<256xf32> to vector<1x256xf32>
    %11 = math.log %10 : vector<1x256xf32>
    %c0_3 = arith.constant 0 : index
    %c0_4 = arith.constant 0 : index
    %12 = vector.load %arg3[%c0_3, %c0_4] : memref<1x256xi32, #tpu.memory_space<vmem>>, vector<1x256xi32>
    %13 = tpu.iota {dimensions = array<i32: 0>} : vector<10x256xi32>
    %14 = vector.broadcast %12 : vector<1x256xi32> to vector<10x256xi32>
    %15 = arith.cmpi eq, %13, %14 : vector<10x256xi32>
    %cst_5 = arith.constant 0.000000e+00 : f32
    %16 = vector.broadcast %cst_5 : f32 to vector<10x256xf32>
    %17 = arith.select %15, %7, %16 : vector<10x256xi1>, vector<10x256xf32>
    %cst_6 = arith.constant dense<0.000000e+00> : vector<256xf32>
    %18 = vector.multi_reduction <add>, %17, %cst_6 [0] : vector<10x256xf32> to vector<256xf32>
    %19 = vector.shape_cast %18 : vector<256xf32> to vector<1x256xf32>
    %20 = arith.subf %19, %11 : vector<1x256xf32>
    %21 = math.exp %20 : vector<1x256xf32>
    %cst_7 = arith.constant 1.000000e+00 : f32
    %22 = vector.broadcast %cst_7 : f32 to vector<1x256xf32>
    %23 = arith.subf %22, %21 : vector<1x256xf32>
    %cst_8 = arith.constant 0.000000e+00 : f32
    %24 = vector.broadcast %cst_8 : f32 to vector<1x256xf32>
    %25 = arith.maximumf %23, %24 : vector<1x256xf32>
    %26 = arith.mulf %25, %25 : vector<1x256xf32>
    %c0_9 = arith.constant 0 : index
    %c0_10 = arith.constant 0 : index
    %27 = vector.load %arg4[%c0_9, %c0_10] : memref<1x256xf32, #tpu.memory_space<vmem>>, vector<1x256xf32>
    %28 = arith.mulf %27, %26 : vector<1x256xf32>
    %29 = arith.mulf %28, %20 : vector<1x256xf32>
    %cst_11 = arith.constant 0.000000e+00 : f32
    %30 = vector.broadcast %cst_11 : f32 to vector<1x256xf32>
    %31 = arith.subf %30, %29 : vector<1x256xf32>
    %c1_i32 = arith.constant 1 : i32
    %32 = arith.muli %arg0, %c1_i32 : i32
    %33 = arith.addi %32, %arg1 : i32
    %c256_i32 = arith.constant 256 : i32
    %34 = arith.muli %33, %c256_i32 : i32
    %35 = tpu.iota {dimensions = array<i32: 1>} : vector<1x256xi32>
    %36 = vector.broadcast %34 : i32 to vector<1x256xi32>
    %37 = arith.addi %36, %35 : vector<1x256xi32>
    %c200_i32 = arith.constant 200 : i32
    %38 = vector.broadcast %c200_i32 : i32 to vector<1x256xi32>
    %39 = arith.cmpi slt, %37, %38 : vector<1x256xi32>
    %cst_12 = arith.constant 0.000000e+00 : f32
    %40 = vector.broadcast %cst_12 : f32 to vector<1x256xf32>
    %41 = arith.select %39, %31, %40 : vector<1x256xi1>, vector<1x256xf32>
    %c0_13 = arith.constant 0 : index
    %c0_14 = arith.constant 0 : index
    %42 = vector.load %arg6[%c0_13, %c0_14] : memref<1x256xf32, #tpu.memory_space<vmem>>, vector<1x256xf32>
    %43 = arith.addf %42, %41 : vector<1x256xf32>
    %c0_15 = arith.constant 0 : index
    %c0_16 = arith.constant 0 : index
    %44 = vector.load %arg6[%c0_15, %c0_16] : memref<1x256xf32, #tpu.memory_space<vmem>>, vector<1x256xf32>
    tpu.vector_store %arg6[%c0_15, %c0_16], %43 {strides = array<i32>} : memref<1x256xf32, #tpu.memory_space<vmem>>, vector<1x256xf32>,
    %c0_i32_17 = arith.constant 0 : i32
    %45 = arith.cmpi eq, %arg1, %c0_i32_17 : i32
    %46 = arith.extui %45 : i1 to i32
    %c0_i32_18 = arith.constant 0 : i32
    %47 = arith.cmpi ne, %46, %c0_i32_18 : i32
    scf.if %47 {
      %c0_19 = arith.constant 0 : index
      %c0_20 = arith.constant 0 : index
      %48 = vector.load %arg6[%c0_19, %c0_20] : memref<1x256xf32, #tpu.memory_space<vmem>>, vector<1x256xf32>
      %49 = vector.shape_cast %48 : vector<1x256xf32> to vector<1x1x256xf32>
      %cst_21 = arith.constant dense<0.000000e+00> : vector<1xf32>
      %50 = vector.multi_reduction <add>, %49, %cst_21 [1, 2] : vector<1x1x256xf32> to vector<1xf32>
      %51 = vector.shape_cast %50 : vector<1xf32> to vector<1x1x1xf32>
      %52 = vector.extract %51[0, 0, 0] : f32 from vector<1x1x1xf32>
      %cst_22 = arith.constant 0.000000e+00 : f32
      %53 = vector.broadcast %cst_22 : f32 to vector<1x8x128xf32>
      %54 = vector.broadcast %52 : f32 to vector<1x8x128xf32>
      %55 = arith.addf %53, %54 : vector<1x8x128xf32>
      %c0_23 = arith.constant 0 : index
      %c0_24 = arith.constant 0 : index
      %c0_25 = arith.constant 0 : index
      %56 = vector.load %arg5[%c0_23, %c0_24, %c0_25] : memref<1x8x128xf32, #tpu.memory_space<vmem>>, vector<1x8x128xf32>
      tpu.vector_store %arg5[%c0_23, %c0_24, %c0_25], %55 {strides = array<i32>} : memref<1x8x128xf32, #tpu.memory_space<vmem>>, vector<1x8x128xf32>,
    } else {
    }
    return
  }
  func.func @transform_0(%arg0: i32, %arg1: i32) -> (i32, i32) {
    %c1_i32 = arith.constant 1 : i32
    %0 = arith.muli %arg0, %c1_i32 : i32
    %1 = arith.addi %0, %arg1 : i32
    %c0_i32 = arith.constant 0 : i32
    %2 = arith.minsi %1, %c0_i32 : i32
    %c0_i32_0 = arith.constant 0 : i32
    %c0_i32_1 = arith.constant 0 : i32
    return %c0_i32_0, %2 : i32, i32
  }
  func.func @transform_1(%arg0: i32, %arg1: i32) -> (i32, i32) {
    %c1_i32 = arith.constant 1 : i32
    %0 = arith.muli %arg0, %c1_i32 : i32
    %1 = arith.addi %0, %arg1 : i32
    %c0_i32 = arith.constant 0 : i32
    %2 = arith.minsi %1, %c0_i32 : i32
    %c0_i32_0 = arith.constant 0 : i32
    %c0_i32_1 = arith.constant 0 : i32
    return %c0_i32_0, %2 : i32, i32
  }
  func.func @transform_2(%arg0: i32, %arg1: i32) -> (i32, i32) {
    %c1_i32 = arith.constant 1 : i32
    %0 = arith.muli %arg0, %c1_i32 : i32
    %1 = arith.addi %0, %arg1 : i32
    %c0_i32 = arith.constant 0 : i32
    %2 = arith.minsi %1, %c0_i32 : i32
    %c0_i32_0 = arith.constant 0 : i32
    %c0_i32_1 = arith.constant 0 : i32
    return %c0_i32_0, %2 : i32, i32
  }
  func.func @transform_3(%arg0: i32, %arg1: i32) -> (i32, i32, i32) {
    %c0_i32 = arith.constant 0 : i32
    %c0_i32_0 = arith.constant 0 : i32
    %c0_i32_1 = arith.constant 0 : i32
    return %arg0, %c0_i32, %c0_i32_0 : i32, i32, i32
  }
}

</mosaic_0001>

<llo_original>
// kernel: tpu_custom_call.1
$region0: #{tpu_custom_call.1}
  #allocation0 [shape = 'u32[]', space=smem, size = 0x4, offset = 0x4, fixed_abs, tag = 'smem constant byte address 0x4 - core index']
  #allocation1 [shape = 'u32[144,128]{1,0:T(1,128)}', space=vmem, size = 0x12000, scoped, tag = 'internal scratch']
  #allocation2 [shape = 'f32[1,256]{1,0:T(1,128)}', space=vmem, size = 0x400, scoped, tag = 'scratch operand']
  %s0 = inlined_call_operand.hbm [shape: f32[10,200], index: 0, kind: input, shape index: {}]
  %s1 = inlined_call_operand.vmem [shape: s32[1,200], index: 1, kind: input, shape index: {}]
  %s2 = inlined_call_operand.vmem [shape: f32[1,200], index: 2, kind: input, shape index: {}]
  %s3 = inlined_call_operand.hbm [shape: f32[1,8,128], index: 3, kind: output, shape index: {}]
  %s4 = sld [smem:[#allocation0]]
  $region34: #{tpu_custom_call.1} parent=0
    _
  %s6 = ssub.s32 1, %s4
  %s7 = scalar_select 0, %s6, %s4
  $region1: #{tpu_custom_call.1} parent=0
    #allocation3 [shape = 'u8[16384]{0}', space=vmem, size = 0x4000, scoped, tag = 'input window, operand 0, single buffered']
    #allocation4 [shape = 's32[1]{0}', space=sflag, size = 0x4, scoped, tag = 'scoped memory for tpu_custom_call.1']
    #allocation5 [shape = 's32[1]{0}', space=sflag, size = 0x4, scoped, tag = 'scoped memory for tpu_custom_call.1']
    #allocation6 [shape = 'u8[4096]{0}', space=vmem, size = 0x1000, scoped, tag = 'output window, operand 0, single buffered']
    %8 = vsyncpa [#allocation4], 0
    %9 = vsyncpa [#allocation5], 0
    // Predicated region
    $region2: #{tpu_custom_call.1} parent=1 // pred_check
      _
    $region3: #{tpu_custom_call.1} parent=1 // pred_check_branch
      %11 = sbr.rel (0) target = $region5
    $region4: #{tpu_custom_call.1} parent=1 // pred_region
      %s12 = sadd.s32 0, 0
      %p13 = scmp.lt.s32.totalorder %s12, 0
      %s14 = scalar_select %p13, %s12, 0
      %s15 = smul.u32 2, %s14
      %s17 = ssub.s32 512, 512
      %18 = vsyncadd [#allocation4], %s17
      %s19 = smul.addr %s15, 128
      %s20 = scalar_lea.hbm %s0, %s19
      %s21 = sshll.u32 [#allocation3], 4
      %s22 = int_to_ptr.vmem [resolvable:$true] %s21
      %27 = dma.hbm_to_vmem [thread:$0]  %s20, 512, %s22, [#allocation4], 256, 256, 16
    $region5: #{tpu_custom_call.1} parent=1 // pred_fallthru
      _
    // Predicated region
    $region6: #{tpu_custom_call.1} parent=1 // pred_check
      _
    $region7: #{tpu_custom_call.1} parent=1 // pred_check_branch
      %29 = sbr.rel (0) target = $region9
    $region8: #{tpu_custom_call.1} parent=1 // pred_region
      %s30 = sadd.s32 0, 0
      %p31 = scmp.lt.s32.totalorder %s30, 0
      %s32 = scalar_select %p31, %s30, 0
      %s33 = smul.u32 2, %s32
      %p34 = scmp.lt.s32.totalorder %s33, 1
      %s35 = scalar_select %p34, %s33, 1
      %s36 = scalar_lea.vmem %s1, %s35
      %s37 = sadd.s32 0, 0
      %p38 = scmp.lt.s32.totalorder %s37, 0
      %s39 = scalar_select %p38, %s37, 0
      %s40 = smul.u32 2, %s39
    $region9: #{tpu_custom_call.1} parent=1 // pred_fallthru
      _
    // Predicated region
    $region10: #{tpu_custom_call.1} parent=1 // pred_check
      _
    $region11: #{tpu_custom_call.1} parent=1 // pred_check_branch
      %42 = sbr.rel (0) target = $region13
    $region12: #{tpu_custom_call.1} parent=1 // pred_region
      %s43 = sadd.s32 0, 0
      %p44 = scmp.lt.s32.totalorder %s43, 0
      %s45 = scalar_select %p44, %s43, 0
      %s46 = smul.u32 2, %s45
      %p47 = scmp.lt.s32.totalorder %s46, 1
      %s48 = scalar_select %p47, %s46, 1
      %s49 = scalar_lea.vmem %s2, %s48
      %s50 = sadd.s32 0, 0
      %p51 = scmp.lt.s32.totalorder %s50, 0
      %s52 = scalar_select %p51, %s50, 0
      %s53 = smul.u32 2, %s52
    $region13: #{tpu_custom_call.1} parent=1 // pred_fallthru
      _
    // Predicated region
    $region14: #{tpu_custom_call.1} parent=1 // pred_check
      _
    $region15: #{tpu_custom_call.1} parent=1 // pred_check_branch
      %55 = sbr.rel (0) target = $region17
    $region16: #{tpu_custom_call.1} parent=1 // pred_region
      %56 = dma.done [#allocation4], 512
    $region17: #{tpu_custom_call.1} parent=1 // pred_fallthru
      _
    %s57 = sadd.s32 0, 0
    %p58 = scmp.lt.s32.totalorder %s57, 0
    %s59 = scalar_select %p58, %s57, 0
    %s60 = smul.u32 2, %s59
    %p61 = scmp.lt.s32.totalorder %s60, 1
    %s62 = scalar_select %p61, %s60, 1
    %s63 = scalar_lea.vmem %s1, %s62
    %s64 = sadd.s32 0, 0
    %p65 = scmp.lt.s32.totalorder %s64, 0
    %s66 = scalar_select %p65, %s64, 0
    %s67 = smul.u32 2, %s66
    %p68 = scmp.lt.s32.totalorder %s67, 1
    %s69 = scalar_select %p68, %s67, 1
    %s70 = scalar_lea.vmem %s2, %s69
    %s71 = sadd.s32 0, 0
    %p72 = scmp.lt.s32.totalorder %s71, 0
    %s73 = scalar_select %p72, %s71, 0
    %s74 = smul.u32 2, %s73
    %s75 = sadd.s32 0, 0
    %p76 = scmp.lt.s32.totalorder %s75, 0
    %s77 = scalar_select %p76, %s75, 0
    %s78 = smul.u32 2, %s77
    %p79 = scmp.lt.s32.totalorder %s78, 1
    %s80 = scalar_select %p79, %s78, 1
    %s81 = scalar_lea.vmem %s1, %s80
    %s82 = sadd.s32 0, 0
    %p83 = scmp.lt.s32.totalorder %s82, 0
    %s84 = scalar_select %p83, %s82, 0
    %s85 = smul.u32 2, %s84
    %s86 = sadd.s32 0, 0
    %p87 = scmp.lt.s32.totalorder %s86, 0
    %s88 = scalar_select %p87, %s86, 0
    %s89 = smul.u32 2, %s88
    %p90 = scmp.lt.s32.totalorder %s89, 1
    %s91 = scalar_select %p90, %s89, 1
    %s92 = scalar_lea.vmem %s2, %s91
    %s93 = sadd.s32 0, 0
    %p94 = scmp.lt.s32.totalorder %s93, 0
    %s95 = scalar_select %p94, %s93, 0
    %s96 = smul.u32 2, %s95
    %p97 = scmp.eq.s32.totalorder 0, 0
    // Predicated region
    $region18: #{tpu_custom_call.1} parent=1 // pred_check
      %p98 = pneg %p97
    $region19: #{tpu_custom_call.1} parent=1 // pred_check_branch
      %100 = sbr.rel (%p98) target = $region21
    $region20: #{tpu_custom_call.1} parent=1 // pred_region
      %v101 = vlaneseq
      %vm102 = vcmp.ge.s32.totalorder %v101, 0
      %vm103 = vcmp.lt.s32.totalorder %v101, 256
      %vm104 = vmand %vm102, %vm103
      %105 = vst.msk [vmem:[#allocation2] sm:$0x3] %vm104, 0.0
    $region21: #{tpu_custom_call.1} parent=1 // pred_fallthru
      _
    %v106 = vld [vmem:[#allocation3] sm:$0xff]
    %v107 = vld [vmem:[#allocation3 + $0x8] sm:$0xff]
    %v108 = vld [vmem:[#allocation3 + $0x10] sm:$0x3]
    %v109 = vld [vmem:[#allocation3 + $0x18] sm:$0x3]
    %vm110 = vcmask 1041408
    %v111 = vsel %vm110, %v108, -inf
    %v112 = vmax.f32 %v106, %v111
    %v113 = vrot.slane %v112, 4
    %v114 = vmax.f32 %v112, %v113
    %v115 = vrot.slane %v114, 2
    %v116 = vmax.f32 %v114, %v115
    %v117 = vrot.slane %v116, 1
    %v118 = vmax.f32 %v116, %v117
    %v119 = vsel %vm110, %v109, -inf
    %v120 = vmax.f32 %v107, %v119
    %v121 = vrot.slane %v120, 4
    %v122 = vmax.f32 %v120, %v121
    %v123 = vrot.slane %v122, 2
    %v124 = vmax.f32 %v122, %v123
    %v125 = vrot.slane %v124, 1
    %v126 = vmax.f32 %v124, %v125
    %v127 = vsub.f32 %v106, %v118
    %v128 = vsub.f32 %v107, %v126
    %v129 = vsub.f32 %v108, %v118
    %v130 = vsub.f32 %v109, %v126
    %v131 = vmul.f32 %v127, 1.442695
    %v132 = vpow.pop %v131
    %v133 = vmul.f32 %v128, 1.442695
    %v134 = vpow.pop %v133
    %v135 = vmul.f32 %v129, 1.442695
    %v136 = vpow.pop %v135
    %v137 = vmul.f32 %v130, 1.442695
    %v138 = vpow.pop %v137
    %v139 = vsel %vm110, %v136, 0.0
    %v140 = vadd.f32 %v132, %v139
    %v141 = vrot.slane %v140, 4
    %v142 = vadd.f32 %v140, %v141
    %v143 = vrot.slane %v142, 2
    %v144 = vadd.f32 %v142, %v143
    %v145 = vrot.slane %v144, 1
    %v146 = vadd.f32 %v144, %v145
    %v147 = vsel %vm110, %v138, 0.0
    %v148 = vadd.f32 %v134, %v147
    %v149 = vrot.slane %v148, 4
    %v150 = vadd.f32 %v148, %v149
    %v151 = vrot.slane %v150, 2
    %v152 = vadd.f32 %v150, %v151
    %v153 = vrot.slane %v152, 1
    %v154 = vadd.f32 %v152, %v153
    %v155 = vlog2.pop %v146
    %v156 = vmul.f32 %v155, 0.6931472
    %v157 = vlog2.pop %v154
    %v158 = vmul.f32 %v157, 0.6931472
    %v159 = vld [vmem:[%s81] sm:$0x3]
    %v160 = vlaneseq
    %v161 = vshrl.u32 %v160, 7
    %v162 = vadd.s32 %v161, 8
    %v163 = vlaneseq
    %v164 = vshrl.u32 %v163, 7
    %v165 = vsub.s32 0, %v164
    %v166 = vrot.slane %v159, %v165
    %v167 = vlaneseq
    %v168 = vshrl.u32 %v167, 7
    %v169 = vsub.s32 1, %v168
    %v170 = vrot.slane %v159, %v169
    %vm171 = vcmp.eq.s32.totalorder %v161, %v166
    %vm172 = vcmp.eq.s32.totalorder %v161, %v170
    %vm173 = vcmp.eq.s32.totalorder %v162, %v166
    %vm174 = vcmp.eq.s32.totalorder %v162, %v170
    %v175 = vsel %vm171, %v127, 0.0
    %v176 = vsel %vm172, %v128, 0.0
    %v177 = vsel %vm173, %v129, 0.0
    %v178 = vsel %vm174, %v130, 0.0
    %v179 = vsel %vm110, %v177, 0.0
    %v180 = vadd.f32 %v175, %v179
    %v181 = vrot.slane %v180, 4
    %v182 = vadd.f32 %v180, %v181
    %v183 = vrot.slane %v182, 2
    %v184 = vadd.f32 %v182, %v183
    %v185 = vrot.slane %v184, 1
    %v186 = vadd.f32 %v184, %v185
    %v187 = vsel %vm110, %v178, 0.0
    %v188 = vadd.f32 %v176, %v187
    %v189 = vrot.slane %v188, 4
    %v190 = vadd.f32 %v188, %v189
    %v191 = vrot.slane %v190, 2
    %v192 = vadd.f32 %v190, %v191
    %v193 = vrot.slane %v192, 1
    %v194 = vadd.f32 %v192, %v193
    %v195 = vsub.f32 %v186, %v156
    %v196 = vsub.f32 %v194, %v158
    %v197 = vmul.f32 %v195, 1.442695
    %v198 = vpow.pop %v197
    %v199 = vmul.f32 %v196, 1.442695
    %v200 = vpow.pop %v199
    %v201 = vsub.f32 1.0, %v198
    %v202 = vsub.f32 1.0, %v200
    %v203 = vmax.f32 %v201, 0.0
    %v204 = vmax.f32 %v202, 0.0
    %v205 = vmul.f32 %v203, %v203
    %v206 = vmul.f32 %v204, %v204
    %v207 = vld [vmem:[%s92] sm:$0x3]
    %v210 = vcombine.low %v205, %v206
    %v212 = vunpack.c.l.s4 1966171168
    %v213 = vunpack.c.0.s8 %v212
    %v214 = vlaneseq
    %v215 = vshrl.u32 %v214, 7
    %v216 = vsub.s32 %v213, %v215
    %v217 = vrot.slane %v210, %v216
    %v219 = vunpack.c.l.s4 1966171168
    %v220 = vunpack.c.0.s8 %v219
    %v221 = vlaneseq
    %v222 = vshrl.u32 %v221, 7
    %v223 = vsub.s32 %v220, %v222
    %v224 = vrot.slane %v217, %v223
    %v226 = vmul.f32 %v207, %v224
    %v229 = vcombine.low %v195, %v196
    %v231 = vunpack.c.l.s4 1966171168
    %v232 = vunpack.c.0.s8 %v231
    %v233 = vlaneseq
    %v234 = vshrl.u32 %v233, 7
    %v235 = vsub.s32 %v232, %v234
    %v236 = vrot.slane %v229, %v235
    %v238 = vunpack.c.l.s4 1966171168
    %v239 = vunpack.c.0.s8 %v238
    %v240 = vlaneseq
    %v241 = vshrl.u32 %v240, 7
    %v242 = vsub.s32 %v239, %v241
    %v243 = vrot.slane %v236, %v242
    %v245 = vmul.f32 %v226, %v243
    %v246 = vsub.f32 0.0, %v245
    %s247 = sadd.s32 0, 0
    %s248 = smul.u32 %s247, 256
    %v249 = vlaneseq
    %v250 = vand.u32 %v249, 127
    %v251 = vadd.s32 %v250, 128
    %v252 = vstv %s248
    %v253 = vadd.s32 %v252, %v250
    %v254 = vadd.s32 %v252, %v251
    %vm255 = vcmp.lt.s32.totalorder %v253, 200
    %vm256 = vcmp.lt.s32.totalorder %v254, 200
    %v258 = vlaneseq
    %v259 = vshrl.u32 %v258, 7
    %v260 = vsub.s32 0, %v259
    %v261 = vrot.slane %v246, %v260
    %v262 = vlaneseq
    %v263 = vshrl.u32 %v262, 7
    %v264 = vsub.s32 1, %v263
    %v265 = vrot.slane %v246, %v264
    %v268 = vsel %vm255, %v261, 0.0
    %v269 = vsel %vm256, %v265, 0.0
    %v270 = vld [vmem:[#allocation2] sm:$0x3]
    %v273 = vcombine.low %v268, %v269
    %v275 = vunpack.c.l.s4 1966171168
    %v276 = vunpack.c.0.s8 %v275
    %v277 = vlaneseq
    %v278 = vshrl.u32 %v277, 7
    %v279 = vsub.s32 %v276, %v278
    %v280 = vrot.slane %v273, %v279
    %v282 = vunpack.c.l.s4 1966171168
    %v283 = vunpack.c.0.s8 %v282
    %v284 = vlaneseq
    %v285 = vshrl.u32 %v284, 7
    %v286 = vsub.s32 %v283, %v285
    %v287 = vrot.slane %v280, %v286
    %v289 = vadd.f32 %v270, %v287
    %v290 = vlaneseq
    %vm291 = vcmp.ge.s32.totalorder %v290, 0
    %vm292 = vcmp.lt.s32.totalorder %v290, 256
    %vm293 = vmand %vm291, %vm292
    %294 = vst.msk [vmem:[#allocation2] sm:$0x3] %vm293, %v289
    // Predicated region
    $region22: #{tpu_custom_call.1} parent=1 // pred_check
      %p295 = pneg %p97
    $region23: #{tpu_custom_call.1} parent=1 // pred_check_branch
      %297 = sbr.rel (%p295) target = $region25
    $region24: #{tpu_custom_call.1} parent=1 // pred_region
      %v298 = vld [vmem:[#allocation2] sm:$0x3]
      %v300 = vlaneseq
      %v301 = vshrl.u32 %v300, 7
      %v302 = vsub.s32 0, %v301
      %v303 = vrot.slane %v298, %v302
      %v304 = vlaneseq
      %v305 = vshrl.u32 %v304, 7
      %v306 = vsub.s32 1, %v305
      %v307 = vrot.slane %v298, %v306
      %vm310 = vcmask 1040384
      %v311 = vsel %vm310, %v303, 0.0
      %v312 = vsel %vm310, %v307, 0.0
      %v313 = vadd.f32 %v311, %v312
      %314 = vadd.xlane.f32.xlu0 %v313
      %v315 = vpop.xlane.xlu0 %314
      %v316 = vrot.slane %v315, 4
      %v317 = vadd.f32 %v315, %v316
      %v318 = vrot.slane %v317, 2
      %v319 = vadd.f32 %v317, %v318
      %v320 = vrot.slane %v319, 1
      %v321 = vadd.f32 %v319, %v320
      %s322 = vtos %v321
      %v323 = vstv %s322
      %v324 = vadd.f32 %v323, 0.0
      %325 = vst [vmem:[#allocation6] sm:$0xff] %v324
    $region25: #{tpu_custom_call.1} parent=1 // pred_fallthru
      _
    // Predicated region
    $region26: #{tpu_custom_call.1} parent=1 // pred_check
      _
    $region27: #{tpu_custom_call.1} parent=1 // pred_check_branch
      %327 = sbr.rel (0) target = $region29
    $region28: #{tpu_custom_call.1} parent=1 // pred_region
      %s329 = ssub.s32 128, 128
      %330 = vsyncadd [#allocation5], %s329
      %s332 = sshll.u32 [#allocation6], 4
      %s333 = int_to_ptr.vmem [resolvable:$true] %s332
      %335 = dma.vmem_to_hbm [thread:$0]  %s333, 128, %s3, [#allocation5]
    $region29: #{tpu_custom_call.1} parent=1 // pred_fallthru
      _
    // Predicated region
    $region30: #{tpu_custom_call.1} parent=1 // pred_check
      _
    $region31: #{tpu_custom_call.1} parent=1 // pred_check_branch
      %337 = sbr.rel (0) target = $region33
    $region32: #{tpu_custom_call.1} parent=1 // pred_region
      %338 = dma.done [#allocation5], 128
    $region33: #{tpu_custom_call.1} parent=1 // pred_fallthru
      _
    %339 = vsyncpa [#allocation4], 1
    %340 = vsyncpa [#allocation5], 1

</llo_original>
